<compile_context>
chip_gen: v5e
topology: v5e:2x2
jax: 0.10.0
libtpu: 0.0.40
codegen_flags: <defaults>
</compile_context>

<pallas_src>
import jax
import jax.numpy as jnp
from jax.experimental import pallas as pl
from jax.experimental.pallas import tpu as pltpu

LANES = 128


def _round_up(v, m):
    return (v + m - 1) // m * m


# ---------------------------------------------------------------------------
# Fast path: IN == 1, OUT == 1  ->  y = x * w + b on the VPU.
# ---------------------------------------------------------------------------
def _affine_1x1_kernel(w_ref, b_ref, x_ref, o_ref):
    # w_ref, b_ref: (1, 128) f32, resident (constant index map).
    # x_ref, o_ref: (ts, 128) f32, batch laid out over sublanes *and* lanes.
    o_ref[...] = x_ref[...] * w_ref[...] + b_ref[...]


def _affine_1x1_forward(x, w_row, b_row):
    """x: (B, 1) f32; w_row, b_row: (1, 128) f32 broadcasts of the scalars."""
    B = x.shape[0]
    rows = -(-B // LANES)                        # cdiv(B, 128)
    ts = min(_round_up(rows, 8), 1024)           # row tile, multiple of 8
    Sp = _round_up(rows, ts)
    total = Sp * LANES

    x_flat = x.astype(jnp.float32).reshape(-1)
    if total != B:
        x_flat = jnp.pad(x_flat, (0, total - B))
    x2d = x_flat.reshape(Sp, LANES)

    y2d = pl.pallas_call(
        _affine_1x1_kernel,
        out_shape=jax.ShapeDtypeStruct((Sp, LANES), jnp.float32),
        grid_spec=pltpu.PrefetchScalarGridSpec(
            num_scalar_prefetch=0,
            grid=(Sp // ts,),
            in_specs=[
                pl.BlockSpec((1, LANES), lambda i: (0, 0)),    # w (resident)
                pl.BlockSpec((1, LANES), lambda i: (0, 0)),    # b (resident)
                pl.BlockSpec((ts, LANES), lambda i: (i, 0)),   # x block
            ],
            out_specs=pl.BlockSpec((ts, LANES), lambda i: (i, 0)),
        ),
        compiler_params=pltpu.CompilerParams(
            dimension_semantics=("parallel",),
        ),
        cost_estimate=pl.CostEstimate(
            flops=2 * B,
            transcendentals=0,
            bytes_accessed=4 * (2 * total + 2 * LANES),
        ),
    )(w_row, b_row, x2d)

    return y2d.reshape(total)[:B].reshape(B, 1)


# ---------------------------------------------------------------------------
# General path: tiled matmul + bias (weight pre-transposed / padded at init).
# ---------------------------------------------------------------------------
def _matmul_bias_kernel_1k(x_ref, wt_ref, b_ref, o_ref):
    # Single K step: no scratch, no predication, bias fused into the store.
    o_ref[...] = (
        jnp.dot(x_ref[...], wt_ref[...], preferred_element_type=jnp.float32)
        + b_ref[...]
    )


def _matmul_bias_kernel_multik(x_ref, wt_ref, b_ref, o_ref):
    # K-last reduction grid; accumulate directly into the (f32) output block,
    # whose block index is constant across k (no separate VMEM accumulator).
    k = pl.program_id(2)

    @pl.when(k == 0)
    def _():
        o_ref[...] = jnp.zeros_like(o_ref)

    o_ref[...] += jnp.dot(
        x_ref[...], wt_ref[...], preferred_element_type=jnp.float32
    )

    @pl.when(k == pl.num_programs(2) - 1)
    def _():
        o_ref[...] += b_ref[...]


def _tiled_linear_forward(x, wt_p, b_p, IN, OUT, tk, tn, Kp, Np):
    """y = x @ W^T + b. wt_p: (Kp, Np) pre-transposed/padded W; b_p: (1, Np)."""
    B = x.shape[0]

    # M tile: full (rounded to 8) when it fits one 512-row tile, else 512.
    Mp8 = _round_up(B, 8)
    if Mp8 <= 512:
        tm, Mp = Mp8, Mp8
    else:
        tm, Mp = 512, _round_up(B, 512)

    x = x.astype(jnp.float32)
    if (Mp, Kp) != (B, IN):
        # Only pads what the tiling actually requires (K padded only if IN>512).
        x = jnp.pad(x, ((0, Mp - B), (0, Kp - IN)))

    gm, gn, nk = Mp // tm, Np // tn, Kp // tk
    bytes_accessed = 4 * (Mp * Kp * gn + Kp * Np * gm + Np * gm + Mp * Np)
    flops = 2 * Mp * Kp * Np + Mp * Np

    if nk == 1:
        kernel = _matmul_bias_kernel_1k
        grid = (gm, gn)
        in_specs = [
            pl.BlockSpec((tm, tk), lambda i, j: (i, 0)),
            pl.BlockSpec((tk, tn), lambda i, j: (0, j)),
            pl.BlockSpec((1, tn), lambda i, j: (0, j)),
        ]
        out_specs = pl.BlockSpec((tm, tn), lambda i, j: (i, j))
        dims = ("parallel", "parallel")
    else:
        kernel = _matmul_bias_kernel_multik
        grid = (gm, gn, nk)
        in_specs = [
            pl.BlockSpec((tm, tk), lambda i, j, k: (i, k)),
            pl.BlockSpec((tk, tn), lambda i, j, k: (k, j)),
            pl.BlockSpec((1, tn), lambda i, j, k: (0, j)),
        ]
        out_specs = pl.BlockSpec((tm, tn), lambda i, j, k: (i, j))
        dims = ("parallel", "parallel", "arbitrary")

    y_p = pl.pallas_call(
        kernel,
        out_shape=jax.ShapeDtypeStruct((Mp, Np), jnp.float32),
        grid_spec=pltpu.PrefetchScalarGridSpec(
            num_scalar_prefetch=0,
            grid=grid,
            in_specs=in_specs,
            out_specs=out_specs,
        ),
        compiler_params=pltpu.CompilerParams(dimension_semantics=dims),
        cost_estimate=pl.CostEstimate(
            flops=flops, transcendentals=0, bytes_accessed=bytes_accessed
        ),
    )(x, wt_p, b_p)

    if (Mp, Np) != (B, OUT):
        y_p = y_p[:B, :OUT]
    return y_p


# ---------------------------------------------------------------------------
# Parameter preparation (done once, at Model.__init__) + dispatch.
# ---------------------------------------------------------------------------
def prepare_linear(weight, bias):
    """Hoist transpose / padding / broadcasts out of the per-call path."""
    OUT, IN = weight.shape
    if IN == 1 and OUT == 1:
        w_row = jnp.broadcast_to(weight.astype(jnp.float32).reshape(1, 1), (1, LANES))
        b_row = jnp.broadcast_to(bias.astype(jnp.float32).reshape(1, 1), (1, LANES))
        return {"kind": "1x1", "IN": IN, "OUT": OUT,
                "w_row": w_row + 0.0, "b_row": b_row + 0.0}

    # Tile plan for K / N (M depends on the batch, chosen per call).
    if IN <= 512:
        tk, Kp = IN, IN                      # single K step, no K padding
    else:
        tk, Kp = 512, _round_up(IN, 512)
    if OUT <= 512:
        tn, Np = OUT, OUT                    # no N padding, no output slice
    else:
        tn, Np = 512, _round_up(OUT, 512)

    wt = weight.T.astype(jnp.float32)        # lane-dense (K, N) MXU feed
    if (Kp, Np) != (IN, OUT):
        wt = jnp.zeros((Kp, Np), jnp.float32).at[:IN, :OUT].set(wt)
    b = bias.astype(jnp.float32).reshape(1, OUT)
    if Np != OUT:
        b = jnp.zeros((1, Np), jnp.float32).at[:, :OUT].set(b)

    return {"kind": "general", "IN": IN, "OUT": OUT,
            "wt": wt, "b": b, "tk": tk, "tn": tn, "Kp": Kp, "Np": Np}


def apply_linear(prep, x):
    if prep["kind"] == "1x1":
        return _affine_1x1_forward(x, prep["w_row"], prep["b_row"])
    return _tiled_linear_forward(
        x, prep["wt"], prep["b"], prep["IN"], prep["OUT"],
        prep["tk"], prep["tn"], prep["Kp"], prep["Np"],
    )


def linear_forward(x, weight, bias):
    """One-shot convenience API (prepares params per call; Model caches them)."""
    return apply_linear(prepare_linear(weight, bias), x)


# ---------------------------------------------------------------------------
# Module
# ---------------------------------------------------------------------------
class Model:
    """JAX/Pallas equivalent of the PyTorch Model(nn.Linear(inp, outp))."""

    def __init__(self, inp, outp, key):
        kw, kb = jax.random.split(key)
        bound = float(inp) ** -0.5  # nn.Linear's U(-1/sqrt(inp), 1/sqrt(inp))
        self.weight = jax.random.uniform(
            kw, (outp, inp), jnp.float32, -bound, bound
        )
        self.bias = jax.random.uniform(kb, (outp,), jnp.float32, -bound, bound)
        # Parameter prep (transpose / pad / broadcast) done once here.
        self._prepared = prepare_linear(self.weight, self.bias)

    def __call__(self, x):
        x = jnp.asarray(x, dtype=jnp.float32)
        if x.ndim == 1:
            x = x.reshape(-1, 1) if self._prepared["IN"] == 1 else x.reshape(1, -1)
        return apply_linear(self._prepared, x)


if __name__ == "__main__":
    key = jax.random.PRNGKey(0)

    # Linear regression: 1 feature -> 1 output, x = linspace(0, 50, 50).
    inp, outp = 1, 1
    B = 50

    model = Model(inp, outp, key)
    x = jnp.linspace(0.0, 50.0, B, dtype=jnp.float32).reshape(B, inp)

    y = model(x)
    jax.block_until_ready(y)
    y_ref = x @ model.weight.T + model.bias
    assert y.shape == (B, outp)
    assert jnp.allclose(y, y_ref, atol=1e-5, rtol=1e-5)

    # General tiled path, single-K-step kernel (non-aligned small shapes).
    k2, k3, k4 = jax.random.split(jax.random.PRNGKey(1), 3)
    Bg, INg, OUTg = 48, 20, 12
    xg = jax.random.normal(k2, (Bg, INg), dtype=jnp.float32)
    wg = jax.random.normal(k3, (OUTg, INg), dtype=jnp.float32)
    bg = jax.random.normal(k4, (OUTg,), dtype=jnp.float32)
    yg = linear_forward(xg, wg, bg)
    jax.block_until_ready(yg)
    assert jnp.allclose(yg, xg @ wg.T + bg, atol=1e-4, rtol=1e-4)

    # General tiled path, multi-K-step kernel (IN > 512 -> K reduction grid).
    k5, k6, k7 = jax.random.split(jax.random.PRNGKey(2), 3)
    Bm, INm, OUTm = 16, 640, 24
    xm = jax.random.normal(k5, (Bm, INm), dtype=jnp.float32)
    wm = jax.random.normal(k6, (OUTm, INm), dtype=jnp.float32)
    bm = jax.random.normal(k7, (OUTm,), dtype=jnp.float32)
    ym = linear_forward(xm, wm, bm)
    jax.block_until_ready(ym)
    assert jnp.allclose(ym, xm @ wm.T + bm, atol=1e-3, rtol=1e-3)

    print("KERNEL_OK")
</pallas_src>

<mosaic_0001>
module attributes {stable_mosaic.version = 11 : i64} {
  func.func @_affine_1x1_kernel(%arg0: i32, %arg1: memref<1x128xf32, #tpu.memory_space<vmem>>, %arg2: memref<1x128xf32, #tpu.memory_space<vmem>>, %arg3: memref<8x128xf32, #tpu.memory_space<vmem>>, %arg4: memref<8x128xf32, #tpu.memory_space<vmem>>) attributes {dimension_semantics = [#tpu.dimension_semantics<parallel>], iteration_bounds = array<i64: 1>, scalar_prefetch = 0 : i64, scratch_operands = 0 : i64, tpu.core_type = #tpu.core_type<tc>, window_params = [{pipeline_mode = #tpu.pipeline_mode<synchronous>, transform_indices = @transform_0, window_bounds = array<i64: 1, 128>}, {pipeline_mode = #tpu.pipeline_mode<synchronous>, transform_indices = @transform_1, window_bounds = array<i64: 1, 128>}, {transform_indices = @transform_2, window_bounds = array<i64: 8, 128>}, {transform_indices = @transform_3, window_bounds = array<i64: 8, 128>}]} {
    %c0 = arith.constant 0 : index
    %c0_0 = arith.constant 0 : index
    %0 = vector.load %arg3[%c0, %c0_0] : memref<8x128xf32, #tpu.memory_space<vmem>>, vector<8x128xf32>
    %c0_1 = arith.constant 0 : index
    %c0_2 = arith.constant 0 : index
    %1 = vector.load %arg1[%c0_1, %c0_2] : memref<1x128xf32, #tpu.memory_space<vmem>>, vector<1x128xf32>
    %2 = vector.broadcast %1 : vector<1x128xf32> to vector<8x128xf32>
    %3 = arith.mulf %0, %2 : vector<8x128xf32>
    %c0_3 = arith.constant 0 : index
    %c0_4 = arith.constant 0 : index
    %4 = vector.load %arg2[%c0_3, %c0_4] : memref<1x128xf32, #tpu.memory_space<vmem>>, vector<1x128xf32>
    %5 = vector.broadcast %4 : vector<1x128xf32> to vector<8x128xf32>
    %6 = arith.addf %3, %5 : vector<8x128xf32>
    %c0_5 = arith.constant 0 : index
    %c0_6 = arith.constant 0 : index
    %7 = vector.load %arg4[%c0_5, %c0_6] : memref<8x128xf32, #tpu.memory_space<vmem>>, vector<8x128xf32>
    tpu.vector_store %arg4[%c0_5, %c0_6], %6 {strides = array<i32>} : memref<8x128xf32, #tpu.memory_space<vmem>>, vector<8x128xf32>,
    return
  }
  func.func @transform_0(%arg0: i32) -> (i32, i32) {
    %c0_i32 = arith.constant 0 : i32
    %c0_i32_0 = arith.constant 0 : i32
    %c0_i32_1 = arith.constant 0 : i32
    return %c0_i32, %c0_i32_0 : i32, i32
  }
  func.func @transform_1(%arg0: i32) -> (i32, i32) {
    %c0_i32 = arith.constant 0 : i32
    %c0_i32_0 = arith.constant 0 : i32
    %c0_i32_1 = arith.constant 0 : i32
    return %c0_i32, %c0_i32_0 : i32, i32
  }
  func.func @transform_2(%arg0: i32) -> (i32, i32) {
    %c0_i32 = arith.constant 0 : i32
    %c0_i32_0 = arith.constant 0 : i32
    return %arg0, %c0_i32 : i32, i32
  }
  func.func @transform_3(%arg0: i32) -> (i32, i32) {
    %c0_i32 = arith.constant 0 : i32
    %c0_i32_0 = arith.constant 0 : i32
    return %arg0, %c0_i32 : i32, i32
  }
}

</mosaic_0001>

<llo_original>
// kernel: tpu_custom_call.1
$region0: #{tpu_custom_call.1}
  #allocation0 [shape = 'u32[]', space=smem, size = 0x4, offset = 0x4, fixed_abs, tag = 'smem constant byte address 0x4 - core index']
  #allocation1 [shape = 'u32[72,128]{1,0:T(1,128)}', space=vmem, size = 0x9000, scoped, tag = 'internal scratch']
  %s0 = inlined_call_operand.hbm [shape: f32[1,128], index: 0, kind: input, shape index: {}]
  %s1 = inlined_call_operand.hbm [shape: f32[1,128], index: 1, kind: input, shape index: {}]
  %s2 = inlined_call_operand.hbm [shape: f32[8,128], index: 2, kind: input, shape index: {}]
  %s3 = inlined_call_operand.hbm [shape: f32[8,128], index: 3, kind: output, shape index: {}]
  %s4 = sld [smem:[#allocation0]]
  $region34: #{tpu_custom_call.1} parent=0
    _
  %s6 = ssub.s32 1, %s4
  %s7 = scalar_select 0, %s6, %s4
  $region1: #{tpu_custom_call.1} parent=0
    #allocation2 [shape = 'u8[512]{0}', space=vmem, size = 0x400, scoped, tag = 'input window, operand 0, single buffered']
    #allocation3 [shape = 's32[1]{0}', space=sflag, size = 0x4, scoped, tag = 'scoped memory for tpu_custom_call.1']
    #allocation4 [shape = 's32[1]{0}', space=sflag, size = 0x4, scoped, tag = 'scoped memory for tpu_custom_call.1']
    #allocation5 [shape = 'u8[512]{0}', space=vmem, size = 0x400, scoped, tag = 'input window, operand 1, single buffered']
    #allocation6 [shape = 's32[1]{0}', space=sflag, size = 0x4, scoped, tag = 'scoped memory for tpu_custom_call.1']
    #allocation7 [shape = 'u8[4096]{0}', space=vmem, size = 0x1000, scoped, tag = 'input window, operand 2, single buffered']
    #allocation8 [shape = 'u8[4096]{0}', space=vmem, size = 0x1000, scoped, tag = 'output window, operand 0, single buffered']
    %8 = vsyncpa [#allocation3], 0
    %9 = vsyncpa [#allocation6], 0
    %10 = vsyncpa [#allocation4], 0
    // Predicated region
    $region2: #{tpu_custom_call.1} parent=1 // pred_check
      _
    $region3: #{tpu_custom_call.1} parent=1 // pred_check_branch
      %12 = sbr.rel (0) target = $region5
    $region4: #{tpu_custom_call.1} parent=1 // pred_region
      %14 = vsyncadd [#allocation3], 0
      %s16 = sshll.u32 %s0, 4
      %s17 = int_to_ptr.hbm [resolvable:$true] %s16
      %s18 = sshll.u32 [#allocation2], 4
      %s19 = int_to_ptr.vmem [resolvable:$true] %s18
      %21 = dma.hbm_to_vmem [thread:$0]  %s17, 16, %s19, [#allocation3]
    $region5: #{tpu_custom_call.1} parent=1 // pred_fallthru
      _
    // Predicated region
    $region6: #{tpu_custom_call.1} parent=1 // pred_check
      _
    $region7: #{tpu_custom_call.1} parent=1 // pred_check_branch
      %23 = sbr.rel (0) target = $region9
    $region8: #{tpu_custom_call.1} parent=1 // pred_region
      %25 = vsyncadd [#allocation6], 0
      %s27 = sshll.u32 %s1, 4
      %s28 = int_to_ptr.hbm [resolvable:$true] %s27
      %s29 = sshll.u32 [#allocation5], 4
      %s30 = int_to_ptr.vmem [resolvable:$true] %s29
      %32 = dma.hbm_to_vmem [thread:$0]  %s28, 16, %s30, [#allocation6]
    $region9: #{tpu_custom_call.1} parent=1 // pred_fallthru
      _
    // Predicated region
    $region10: #{tpu_custom_call.1} parent=1 // pred_check
      _
    $region11: #{tpu_custom_call.1} parent=1 // pred_check_branch
      %34 = sbr.rel (0) target = $region13
    $region12: #{tpu_custom_call.1} parent=1 // pred_region
      %36 = vsyncadd [#allocation6], 0
      %s38 = sshll.u32 %s2, 4
      %s39 = int_to_ptr.hbm [resolvable:$true] %s38
      %s40 = sshll.u32 [#allocation7], 4
      %s41 = int_to_ptr.vmem [resolvable:$true] %s40
      %43 = dma.hbm_to_vmem [thread:$0]  %s39, 128, %s41, [#allocation6]
    $region13: #{tpu_custom_call.1} parent=1 // pred_fallthru
      _
    // Predicated region
    $region14: #{tpu_custom_call.1} parent=1 // pred_check
      _
    $region15: #{tpu_custom_call.1} parent=1 // pred_check_branch
      %45 = sbr.rel (0) target = $region17
    $region16: #{tpu_custom_call.1} parent=1 // pred_region
      %47 = dma.done [#allocation3], 16
    $region17: #{tpu_custom_call.1} parent=1 // pred_fallthru
      _
    // Predicated region
    $region18: #{tpu_custom_call.1} parent=1 // pred_check
      _
    $region19: #{tpu_custom_call.1} parent=1 // pred_check_branch
      %49 = sbr.rel (0) target = $region21
    $region20: #{tpu_custom_call.1} parent=1 // pred_region
      %51 = dma.done [#allocation6], 16
    $region21: #{tpu_custom_call.1} parent=1 // pred_fallthru
      _
    // Predicated region
    $region22: #{tpu_custom_call.1} parent=1 // pred_check
      _
    $region23: #{tpu_custom_call.1} parent=1 // pred_check_branch
      %53 = sbr.rel (0) target = $region25
    $region24: #{tpu_custom_call.1} parent=1 // pred_region
      %55 = dma.done [#allocation6], 128
    $region25: #{tpu_custom_call.1} parent=1 // pred_fallthru
      _
    %v56 = vld [vmem:[#allocation7] sm:$0xff]
    %v57 = vld [vmem:[#allocation2] sm:$0x1]
    %v59 = vperm.slane %v57, 0
    %v61 = vmul.f32 %v56, %v59
    %v62 = vld [vmem:[#allocation5] sm:$0x1]
    %v64 = vperm.slane %v62, 0
    %v66 = vadd.f32 %v61, %v64
    %67 = vst [vmem:[#allocation8] sm:$0xff] %v66
    // Predicated region
    $region26: #{tpu_custom_call.1} parent=1 // pred_check
      _
    $region27: #{tpu_custom_call.1} parent=1 // pred_check_branch
      %69 = sbr.rel (0) target = $region29
    $region28: #{tpu_custom_call.1} parent=1 // pred_region
      %71 = vsyncadd [#allocation4], 0
      %s73 = sshll.u32 [#allocation8], 4
      %s74 = int_to_ptr.vmem [resolvable:$true] %s73
      %s75 = sshll.u32 %s3, 4
      %s76 = int_to_ptr.hbm [resolvable:$true] %s75
      %78 = dma.vmem_to_hbm [thread:$0]  %s74, 128, %s76, [#allocation4]
    $region29: #{tpu_custom_call.1} parent=1 // pred_fallthru
      _
    // Predicated region
    $region30: #{tpu_custom_call.1} parent=1 // pred_check
      _
    $region31: #{tpu_custom_call.1} parent=1 // pred_check_branch
      %80 = sbr.rel (0) target = $region33
    $region32: #{tpu_custom_call.1} parent=1 // pred_region
      %82 = dma.done [#allocation4], 128
    $region33: #{tpu_custom_call.1} parent=1 // pred_fallthru
      _
    %83 = vsyncpa [#allocation3], 1
    %84 = vsyncpa [#allocation6], 1
    %85 = vsyncpa [#allocation4], 1

</llo_original>
